<compile_context>
chip_gen: v7x
topology: tpu7x:2x2x1
jax: 0.10.0
libtpu: 0.0.40
codegen_flags: <defaults>
</compile_context>

<pallas_src>
import functools
import math

import jax
import jax.numpy as jnp
from jax.experimental import pallas as pl
from jax.experimental.pallas import tpu as pltpu  # noqa: F401  (kept for clarity)


# ----------------------------- configuration ------------------------------
EMBED = 32          # embedding dimension
HEADS = 4           # attention heads  (head dim = EMBED // HEADS = 8)
BLOCKS = 2          # transformer blocks
BATCH = 2
SEQ = 8


def _rms_norm(x):
    # x / sqrt(mean(x^2, -1))  via EUP rsqrt (no divide).
    ms = jnp.mean(x * x, axis=-1, keepdims=True)
    return x * jax.lax.rsqrt(ms)


def _silu(x):
    # sigmoid(x) = 0.5 * (1 + tanh(x/2)) keeps the transcendental on the EUP
    # slot and avoids a full-width exact f32 divide.
    return x * (0.5 * (jnp.tanh(0.5 * x) + 1.0))


# ------------------------------- the kernel -------------------------------
def transformer_kernel(
    x_ref,      # (R, E)     flattened activations, R = B*S
    wa1q_ref,   # (L, E, E)  q-columns of attention linear_1 (pre-scaled by 1/4)
    wa2_ref,    # (L, E, E)  attention linear_2
    wm1_ref,    # (L, E, 3E) mlp linear_1 weight
    bm1_ref,    # (L, 1, 3E) mlp linear_1 bias
    wm2_ref,    # (L, 3E, E) mlp linear_2 weight
    bm2_ref,    # (L, 1, E)  mlp linear_2 bias
    o_ref,      # (R, E)
    *,
    heads: int,
    n_blocks: int,
):
    R, E = x_ref.shape
    e = E // heads
    shift = e.bit_length() - 1          # e is a power of two (checked in wrapper)

    # Block-diagonal all-ones (E, E) "same head" matrix, built once per call.
    rg = jax.lax.broadcasted_iota(jnp.int32, (E, E), 0) >> shift
    cg = jax.lax.broadcasted_iota(jnp.int32, (E, E), 1) >> shift
    head_ones = (rg == cg).astype(jnp.float32)

    x = x_ref[...]                      # residual stream, lives in vregs/VMEM
    for l in range(n_blocks):           # tiny, statically unrolled
        # -------- attention:  x = x + softmax_per_head(q/4) @ wa2 ----------
        # The reference's K^T.V softmax branch is mathematically inert (its
        # row-sums are exactly 1), so the attention logits are just q/4.
        h = _rms_norm(x)
        q = jnp.dot(h, wa1q_ref[l], preferred_element_type=jnp.float32)   # (R, E)
        rowmax = jnp.max(q, axis=-1, keepdims=True)   # constant per row => per head
        p = jnp.exp(q - rowmax)
        denom = jnp.dot(p, head_ones, preferred_element_type=jnp.float32)  # per-head sums
        attn = p * (1.0 / denom)                      # per-head softmax
        x = x + jnp.dot(attn, wa2_ref[l], preferred_element_type=jnp.float32)

        # ---------------- mlp branch:  x = x + MLP(rms_norm(x)) ------------
        h2 = _rms_norm(x)
        m1 = _silu(jnp.dot(h2, wm1_ref[l], preferred_element_type=jnp.float32)
                   + bm1_ref[l])
        m2 = _silu(jnp.dot(m1, wm2_ref[l], preferred_element_type=jnp.float32)
                   + bm2_ref[l])
        x = x + m2

    o_ref[...] = x.astype(o_ref.dtype)


# ------------------------------ python wrapper -----------------------------
@functools.partial(jax.jit, static_argnames=("heads",))
def run_transformer(x, params_list, *, heads):
    """x: (B, S, E); params_list: list (one per block) of
    (wa1, wa2, wm1, bm1, wm2, bm2) with shapes
    (E,3E), (E,E), (E,3E), (1,3E), (3E,E), (1,E)."""
    B, S, E = x.shape
    e = E // heads
    assert e * heads == E and (e & (e - 1)) == 0, "head dim must be a power of two"
    n_blocks = len(params_list)

    # Only the q columns of attention linear_1 matter (the K^T.V branch of
    # linear_attention multiplies q by softmax row-sums == 1); fold the exact
    # power-of-two 1/4 scale into them host-side.
    wa1q = jnp.stack([p[0][:, :E] for p in params_list]) * 0.25   # (L, E, E)
    wa2 = jnp.stack([p[1] for p in params_list])                  # (L, E, E)
    wm1 = jnp.stack([p[2] for p in params_list])                  # (L, E, 3E)
    bm1 = jnp.stack([p[3] for p in params_list])                  # (L, 1, 3E)
    wm2 = jnp.stack([p[4] for p in params_list])                  # (L, 3E, E)
    bm2 = jnp.stack([p[5] for p in params_list])                  # (L, 1, E)

    R = B * S
    x2 = x.reshape(R, E)    # fold batch into sublanes: every op works on R rows

    # Single invocation, no grid: all weights + activations (~100 KB) are
    # VMEM-resident for the whole call; blocks are unrolled inside the kernel.
    # TODO(synk): on v7x the two batch elements could be sharded across the
    # 2 TensorCores with a 'parallel' grid axis; at R=16 the per-step overhead
    # likely eats the gain, so we keep one resident invocation everywhere.
    out2 = pl.pallas_call(
        functools.partial(transformer_kernel, heads=heads, n_blocks=n_blocks),
        out_shape=jax.ShapeDtypeStruct((R, E), x.dtype),
    )(x2, wa1q, wa2, wm1, bm1, wm2, bm2)
    return out2.reshape(B, S, E)


# --------------------------- parameter construction ------------------------
def init_params(key, *, embed, blocks):
    """Deterministic init mimicking torch.nn.Linear default (uniform +/- 1/sqrt(fan_in))."""
    def uniform(k, shape, fan_in):
        bound = 1.0 / math.sqrt(fan_in)
        return jax.random.uniform(k, shape, jnp.float32, -bound, bound)

    all_params = []
    for _ in range(blocks):
        key, *ks = jax.random.split(key, 7)
        wa1 = uniform(ks[0], (embed, 3 * embed), embed)      # attn linear_1, no bias
        wa2 = uniform(ks[1], (embed, embed), embed)          # attn linear_2, no bias
        wm1 = uniform(ks[2], (embed, 3 * embed), embed)      # mlp linear_1
        bm1 = uniform(ks[3], (1, 3 * embed), embed)
        wm2 = uniform(ks[4], (3 * embed, embed), 3 * embed)  # mlp linear_2
        bm2 = uniform(ks[5], (1, embed), 3 * embed)
        all_params.append((wa1, wa2, wm1, bm1, wm2, bm2))
    return all_params


# ------------------------------ pure-JAX reference -------------------------
def reference_forward(x, all_params, *, heads):
    """Faithful port of the PyTorch module (including the full K^T.V branch)."""
    def rmsn(t):
        return t / jnp.sqrt(jnp.mean(t * t, axis=-1, keepdims=True))

    for (wa1, wa2, wm1, bm1, wm2, bm2) in all_params:
        B, S, E = x.shape
        e = E // heads
        h = rmsn(x)
        y = h @ wa1                                        # (B, S, 3E)
        q, k, v = jnp.split(y, 3, axis=-1)
        # (B, S, H, e) -> (B, H, S, e)
        q = q.reshape(B, S, heads, e).transpose(0, 2, 1, 3)
        k = k.reshape(B, S, heads, e).transpose(0, 2, 1, 3)
        v = v.reshape(B, S, heads, e).transpose(0, 2, 1, 3)
        score = jax.nn.softmax(jnp.einsum('bhnk,bhnc->bhkc', k / 4, v), axis=-1)
        a = jax.nn.softmax(jnp.einsum('bhnk,bhkc->bhnk', q / 4, score), axis=-1)
        a = a.transpose(0, 2, 1, 3).reshape(B, S, E)       # b h s e -> b s (h e)
        x = x + a @ wa2
        h2 = rmsn(x)
        m1 = jax.nn.silu(h2 @ wm1 + bm1[0])
        m2 = jax.nn.silu(m1 @ wm2 + bm2[0])
        x = x + m2
    return x


# ----------------------------------- main ----------------------------------
if __name__ == "__main__":
    key = jax.random.PRNGKey(0)
    kx, kp = jax.random.split(key)
    x = jax.random.normal(kx, (BATCH, SEQ, EMBED), dtype=jnp.float32)
    params = init_params(kp, embed=EMBED, blocks=BLOCKS)

    out = run_transformer(x, params, heads=HEADS)
    out = jax.block_until_ready(out)

    ref = reference_forward(x, params, heads=HEADS)
    assert out.shape == (BATCH, SEQ, EMBED)
    assert jnp.allclose(out, ref, rtol=1e-4, atol=1e-4), "mismatch vs reference"

    print("KERNEL_OK")
</pallas_src>

<mosaic_0001>
module attributes {stable_mosaic.version = 11 : i64} {
  func.func @transformer_kernel(%arg0: memref<16x32xf32, #tpu.memory_space<vmem>>, %arg1: memref<2x32x32xf32, #tpu.memory_space<vmem>>, %arg2: memref<2x32x32xf32, #tpu.memory_space<vmem>>, %arg3: memref<2x32x96xf32, #tpu.memory_space<vmem>>, %arg4: memref<2x1x96xf32, #tpu.memory_space<vmem>>, %arg5: memref<2x96x32xf32, #tpu.memory_space<vmem>>, %arg6: memref<2x1x32xf32, #tpu.memory_space<vmem>>, %arg7: memref<16x32xf32, #tpu.memory_space<vmem>>) attributes {dimension_semantics = [], scalar_prefetch = 0 : i64, scratch_operands = 0 : i64, tpu.core_type = #tpu.core_type<tc>} {
    %0 = tpu.iota {dimensions = array<i32: 0>} : vector<32x32xi32>
    %c3_i32 = arith.constant 3 : i32
    %1 = vector.broadcast %c3_i32 : i32 to vector<32x32xi32>
    %2 = arith.shrsi %0, %1 : vector<32x32xi32>
    %3 = tpu.iota {dimensions = array<i32: 1>} : vector<32x32xi32>
    %c3_i32_0 = arith.constant 3 : i32
    %4 = vector.broadcast %c3_i32_0 : i32 to vector<32x32xi32>
    %5 = arith.shrsi %3, %4 : vector<32x32xi32>
    %6 = arith.cmpi eq, %2, %5 : vector<32x32xi32>
    %7 = arith.extui %6 : vector<32x32xi1> to vector<32x32xi32>
    %8 = arith.sitofp %7 : vector<32x32xi32> to vector<32x32xf32>
    %c0 = arith.constant 0 : index
    %c0_1 = arith.constant 0 : index
    %9 = vector.load %arg0[%c0, %c0_1] : memref<16x32xf32, #tpu.memory_space<vmem>>, vector<16x32xf32>
    %10 = arith.mulf %9, %9 : vector<16x32xf32>
    %cst = arith.constant dense<0.000000e+00> : vector<16xf32>
    %11 = vector.multi_reduction <add>, %10, %cst [1] : vector<16x32xf32> to vector<16xf32>
    %12 = vector.shape_cast %11 : vector<16xf32> to vector<16x1xf32>
    %cst_2 = arith.constant 3.200000e+01 : f32
    %13 = vector.broadcast %cst_2 : f32 to vector<16x1xf32>
    %14 = arith.divf %12, %13 : vector<16x1xf32>
    %15 = math.rsqrt %14 : vector<16x1xf32>
    %16 = vector.broadcast %15 : vector<16x1xf32> to vector<16x32xf32>
    %17 = arith.mulf %9, %16 : vector<16x32xf32>
    %c0_3 = arith.constant 0 : index
    %c0_4 = arith.constant 0 : index
    %c0_5 = arith.constant 0 : index
    %18 = vector.load %arg1[%c0_3, %c0_4, %c0_5] : memref<2x32x32xf32, #tpu.memory_space<vmem>>, vector<1x32x32xf32>
    %19 = vector.shape_cast %18 : vector<1x32x32xf32> to vector<32x32xf32>
    %cst_6 = arith.constant dense<0.000000e+00> : vector<16x32xf32>
    %20 = tpu.matmul %17, %19, %cst_6 {dimension_numbers = #tpu.dot_dimension_numbers<[1], [0], [0], [1], [0, 0, 1, 1], [], []>} : vector<16x32xf32>, vector<32x32xf32>, vector<16x32xf32> -> vector<16x32xf32>
    %cst_7 = arith.constant dense<0xFF800000> : vector<16xf32>
    %21 = vector.multi_reduction <maximumf>, %20, %cst_7 [1] : vector<16x32xf32> to vector<16xf32>
    %22 = vector.shape_cast %21 : vector<16xf32> to vector<16x1xf32>
    %23 = vector.broadcast %22 : vector<16x1xf32> to vector<16x32xf32>
    %24 = arith.subf %20, %23 : vector<16x32xf32>
    %25 = math.exp %24 : vector<16x32xf32>
    %cst_8 = arith.constant dense<0.000000e+00> : vector<16x32xf32>
    %26 = tpu.matmul %25, %8, %cst_8 {dimension_numbers = #tpu.dot_dimension_numbers<[1], [0], [0], [1], [0, 0, 1, 1], [], []>} : vector<16x32xf32>, vector<32x32xf32>, vector<16x32xf32> -> vector<16x32xf32>
    %cst_9 = arith.constant 1.000000e+00 : f32
    %27 = vector.broadcast %cst_9 : f32 to vector<16x32xf32>
    %28 = arith.divf %27, %26 : vector<16x32xf32>
    %29 = arith.mulf %25, %28 : vector<16x32xf32>
    %c0_10 = arith.constant 0 : index
    %c0_11 = arith.constant 0 : index
    %c0_12 = arith.constant 0 : index
    %30 = vector.load %arg2[%c0_10, %c0_11, %c0_12] : memref<2x32x32xf32, #tpu.memory_space<vmem>>, vector<1x32x32xf32>
    %31 = vector.shape_cast %30 : vector<1x32x32xf32> to vector<32x32xf32>
    %cst_13 = arith.constant dense<0.000000e+00> : vector<16x32xf32>
    %32 = tpu.matmul %29, %31, %cst_13 {dimension_numbers = #tpu.dot_dimension_numbers<[1], [0], [0], [1], [0, 0, 1, 1], [], []>} : vector<16x32xf32>, vector<32x32xf32>, vector<16x32xf32> -> vector<16x32xf32>
    %33 = arith.addf %9, %32 : vector<16x32xf32>
    %34 = arith.mulf %33, %33 : vector<16x32xf32>
    %cst_14 = arith.constant dense<0.000000e+00> : vector<16xf32>
    %35 = vector.multi_reduction <add>, %34, %cst_14 [1] : vector<16x32xf32> to vector<16xf32>
    %36 = vector.shape_cast %35 : vector<16xf32> to vector<16x1xf32>
    %cst_15 = arith.constant 3.200000e+01 : f32
    %37 = vector.broadcast %cst_15 : f32 to vector<16x1xf32>
    %38 = arith.divf %36, %37 : vector<16x1xf32>
    %39 = math.rsqrt %38 : vector<16x1xf32>
    %40 = vector.broadcast %39 : vector<16x1xf32> to vector<16x32xf32>
    %41 = arith.mulf %33, %40 : vector<16x32xf32>
    %c0_16 = arith.constant 0 : index
    %c0_17 = arith.constant 0 : index
    %c0_18 = arith.constant 0 : index
    %42 = vector.load %arg3[%c0_16, %c0_17, %c0_18] : memref<2x32x96xf32, #tpu.memory_space<vmem>>, vector<1x32x96xf32>
    %43 = vector.shape_cast %42 : vector<1x32x96xf32> to vector<32x96xf32>
    %cst_19 = arith.constant dense<0.000000e+00> : vector<16x96xf32>
    %44 = tpu.matmul %41, %43, %cst_19 {dimension_numbers = #tpu.dot_dimension_numbers<[1], [0], [0], [1], [0, 0, 1, 1], [], []>} : vector<16x32xf32>, vector<32x96xf32>, vector<16x96xf32> -> vector<16x96xf32>
    %c0_20 = arith.constant 0 : index
    %c0_21 = arith.constant 0 : index
    %c0_22 = arith.constant 0 : index
    %45 = vector.load %arg4[%c0_20, %c0_21, %c0_22] : memref<2x1x96xf32, #tpu.memory_space<vmem>>, vector<1x1x96xf32>
    %46 = vector.shape_cast %45 : vector<1x1x96xf32> to vector<1x96xf32>
    %47 = vector.broadcast %46 : vector<1x96xf32> to vector<16x96xf32>
    %48 = arith.addf %44, %47 : vector<16x96xf32>
    %cst_23 = arith.constant 5.000000e-01 : f32
    %49 = vector.broadcast %cst_23 : f32 to vector<16x96xf32>
    %50 = arith.mulf %49, %48 : vector<16x96xf32>
    %51 = math.tanh %50 : vector<16x96xf32>
    %cst_24 = arith.constant 1.000000e+00 : f32
    %52 = vector.broadcast %cst_24 : f32 to vector<16x96xf32>
    %53 = arith.addf %51, %52 : vector<16x96xf32>
    %cst_25 = arith.constant 5.000000e-01 : f32
    %54 = vector.broadcast %cst_25 : f32 to vector<16x96xf32>
    %55 = arith.mulf %54, %53 : vector<16x96xf32>
    %56 = arith.mulf %48, %55 : vector<16x96xf32>
    %c0_26 = arith.constant 0 : index
    %c0_27 = arith.constant 0 : index
    %c0_28 = arith.constant 0 : index
    %57 = vector.load %arg5[%c0_26, %c0_27, %c0_28] : memref<2x96x32xf32, #tpu.memory_space<vmem>>, vector<1x96x32xf32>
    %58 = vector.shape_cast %57 : vector<1x96x32xf32> to vector<96x32xf32>
    %cst_29 = arith.constant dense<0.000000e+00> : vector<16x32xf32>
    %59 = tpu.matmul %56, %58, %cst_29 {dimension_numbers = #tpu.dot_dimension_numbers<[1], [0], [0], [1], [0, 0, 1, 1], [], []>} : vector<16x96xf32>, vector<96x32xf32>, vector<16x32xf32> -> vector<16x32xf32>
    %c0_30 = arith.constant 0 : index
    %c0_31 = arith.constant 0 : index
    %c0_32 = arith.constant 0 : index
    %60 = vector.load %arg6[%c0_30, %c0_31, %c0_32] : memref<2x1x32xf32, #tpu.memory_space<vmem>>, vector<1x1x32xf32>
    %61 = vector.shape_cast %60 : vector<1x1x32xf32> to vector<1x32xf32>
    %62 = vector.broadcast %61 : vector<1x32xf32> to vector<16x32xf32>
    %63 = arith.addf %59, %62 : vector<16x32xf32>
    %cst_33 = arith.constant 5.000000e-01 : f32
    %64 = vector.broadcast %cst_33 : f32 to vector<16x32xf32>
    %65 = arith.mulf %64, %63 : vector<16x32xf32>
    %66 = math.tanh %65 : vector<16x32xf32>
    %cst_34 = arith.constant 1.000000e+00 : f32
    %67 = vector.broadcast %cst_34 : f32 to vector<16x32xf32>
    %68 = arith.addf %66, %67 : vector<16x32xf32>
    %cst_35 = arith.constant 5.000000e-01 : f32
    %69 = vector.broadcast %cst_35 : f32 to vector<16x32xf32>
    %70 = arith.mulf %69, %68 : vector<16x32xf32>
    %71 = arith.mulf %63, %70 : vector<16x32xf32>
    %72 = arith.addf %33, %71 : vector<16x32xf32>
    %73 = arith.mulf %72, %72 : vector<16x32xf32>
    %cst_36 = arith.constant dense<0.000000e+00> : vector<16xf32>
    %74 = vector.multi_reduction <add>, %73, %cst_36 [1] : vector<16x32xf32> to vector<16xf32>
    %75 = vector.shape_cast %74 : vector<16xf32> to vector<16x1xf32>
    %cst_37 = arith.constant 3.200000e+01 : f32
    %76 = vector.broadcast %cst_37 : f32 to vector<16x1xf32>
    %77 = arith.divf %75, %76 : vector<16x1xf32>
    %78 = math.rsqrt %77 : vector<16x1xf32>
    %79 = vector.broadcast %78 : vector<16x1xf32> to vector<16x32xf32>
    %80 = arith.mulf %72, %79 : vector<16x32xf32>
    %c1 = arith.constant 1 : index
    %c0_38 = arith.constant 0 : index
    %c0_39 = arith.constant 0 : index
    %81 = vector.load %arg1[%c1, %c0_38, %c0_39] : memref<2x32x32xf32, #tpu.memory_space<vmem>>, vector<1x32x32xf32>
    %82 = vector.shape_cast %81 : vector<1x32x32xf32> to vector<32x32xf32>
    %cst_40 = arith.constant dense<0.000000e+00> : vector<16x32xf32>
    %83 = tpu.matmul %80, %82, %cst_40 {dimension_numbers = #tpu.dot_dimension_numbers<[1], [0], [0], [1], [0, 0, 1, 1], [], []>} : vector<16x32xf32>, vector<32x32xf32>, vector<16x32xf32> -> vector<16x32xf32>
    %cst_41 = arith.constant dense<0xFF800000> : vector<16xf32>
    %84 = vector.multi_reduction <maximumf>, %83, %cst_41 [1] : vector<16x32xf32> to vector<16xf32>
    %85 = vector.shape_cast %84 : vector<16xf32> to vector<16x1xf32>
    %86 = vector.broadcast %85 : vector<16x1xf32> to vector<16x32xf32>
    %87 = arith.subf %83, %86 : vector<16x32xf32>
    %88 = math.exp %87 : vector<16x32xf32>
    %cst_42 = arith.constant dense<0.000000e+00> : vector<16x32xf32>
    %89 = tpu.matmul %88, %8, %cst_42 {dimension_numbers = #tpu.dot_dimension_numbers<[1], [0], [0], [1], [0, 0, 1, 1], [], []>} : vector<16x32xf32>, vector<32x32xf32>, vector<16x32xf32> -> vector<16x32xf32>
    %cst_43 = arith.constant 1.000000e+00 : f32
    %90 = vector.broadcast %cst_43 : f32 to vector<16x32xf32>
    %91 = arith.divf %90, %89 : vector<16x32xf32>
    %92 = arith.mulf %88, %91 : vector<16x32xf32>
    %c1_44 = arith.constant 1 : index
    %c0_45 = arith.constant 0 : index
    %c0_46 = arith.constant 0 : index
    %93 = vector.load %arg2[%c1_44, %c0_45, %c0_46] : memref<2x32x32xf32, #tpu.memory_space<vmem>>, vector<1x32x32xf32>
    %94 = vector.shape_cast %93 : vector<1x32x32xf32> to vector<32x32xf32>
    %cst_47 = arith.constant dense<0.000000e+00> : vector<16x32xf32>
    %95 = tpu.matmul %92, %94, %cst_47 {dimension_numbers = #tpu.dot_dimension_numbers<[1], [0], [0], [1], [0, 0, 1, 1], [], []>} : vector<16x32xf32>, vector<32x32xf32>, vector<16x32xf32> -> vector<16x32xf32>
    %96 = arith.addf %72, %95 : vector<16x32xf32>
    %97 = arith.mulf %96, %96 : vector<16x32xf32>
    %cst_48 = arith.constant dense<0.000000e+00> : vector<16xf32>
    %98 = vector.multi_reduction <add>, %97, %cst_48 [1] : vector<16x32xf32> to vector<16xf32>
    %99 = vector.shape_cast %98 : vector<16xf32> to vector<16x1xf32>
    %cst_49 = arith.constant 3.200000e+01 : f32
    %100 = vector.broadcast %cst_49 : f32 to vector<16x1xf32>
    %101 = arith.divf %99, %100 : vector<16x1xf32>
    %102 = math.rsqrt %101 : vector<16x1xf32>
    %103 = vector.broadcast %102 : vector<16x1xf32> to vector<16x32xf32>
    %104 = arith.mulf %96, %103 : vector<16x32xf32>
    %c1_50 = arith.constant 1 : index
    %c0_51 = arith.constant 0 : index
    %c0_52 = arith.constant 0 : index
    %105 = vector.load %arg3[%c1_50, %c0_51, %c0_52] : memref<2x32x96xf32, #tpu.memory_space<vmem>>, vector<1x32x96xf32>
    %106 = vector.shape_cast %105 : vector<1x32x96xf32> to vector<32x96xf32>
    %cst_53 = arith.constant dense<0.000000e+00> : vector<16x96xf32>
    %107 = tpu.matmul %104, %106, %cst_53 {dimension_numbers = #tpu.dot_dimension_numbers<[1], [0], [0], [1], [0, 0, 1, 1], [], []>} : vector<16x32xf32>, vector<32x96xf32>, vector<16x96xf32> -> vector<16x96xf32>
    %c1_54 = arith.constant 1 : index
    %c0_55 = arith.constant 0 : index
    %c0_56 = arith.constant 0 : index
    %108 = vector.load %arg4[%c1_54, %c0_55, %c0_56] : memref<2x1x96xf32, #tpu.memory_space<vmem>>, vector<1x1x96xf32>
    %109 = vector.shape_cast %108 : vector<1x1x96xf32> to vector<1x96xf32>
    %110 = vector.broadcast %109 : vector<1x96xf32> to vector<16x96xf32>
    %111 = arith.addf %107, %110 : vector<16x96xf32>
    %cst_57 = arith.constant 5.000000e-01 : f32
    %112 = vector.broadcast %cst_57 : f32 to vector<16x96xf32>
    %113 = arith.mulf %112, %111 : vector<16x96xf32>
    %114 = math.tanh %113 : vector<16x96xf32>
    %cst_58 = arith.constant 1.000000e+00 : f32
    %115 = vector.broadcast %cst_58 : f32 to vector<16x96xf32>
    %116 = arith.addf %114, %115 : vector<16x96xf32>
    %cst_59 = arith.constant 5.000000e-01 : f32
    %117 = vector.broadcast %cst_59 : f32 to vector<16x96xf32>
    %118 = arith.mulf %117, %116 : vector<16x96xf32>
    %119 = arith.mulf %111, %118 : vector<16x96xf32>
    %c1_60 = arith.constant 1 : index
    %c0_61 = arith.constant 0 : index
    %c0_62 = arith.constant 0 : index
    %120 = vector.load %arg5[%c1_60, %c0_61, %c0_62] : memref<2x96x32xf32, #tpu.memory_space<vmem>>, vector<1x96x32xf32>
    %121 = vector.shape_cast %120 : vector<1x96x32xf32> to vector<96x32xf32>
    %cst_63 = arith.constant dense<0.000000e+00> : vector<16x32xf32>
    %122 = tpu.matmul %119, %121, %cst_63 {dimension_numbers = #tpu.dot_dimension_numbers<[1], [0], [0], [1], [0, 0, 1, 1], [], []>} : vector<16x96xf32>, vector<96x32xf32>, vector<16x32xf32> -> vector<16x32xf32>
    %c1_64 = arith.constant 1 : index
    %c0_65 = arith.constant 0 : index
    %c0_66 = arith.constant 0 : index
    %123 = vector.load %arg6[%c1_64, %c0_65, %c0_66] : memref<2x1x32xf32, #tpu.memory_space<vmem>>, vector<1x1x32xf32>
    %124 = vector.shape_cast %123 : vector<1x1x32xf32> to vector<1x32xf32>
    %125 = vector.broadcast %124 : vector<1x32xf32> to vector<16x32xf32>
    %126 = arith.addf %122, %125 : vector<16x32xf32>
    %cst_67 = arith.constant 5.000000e-01 : f32
    %127 = vector.broadcast %cst_67 : f32 to vector<16x32xf32>
    %128 = arith.mulf %127, %126 : vector<16x32xf32>
    %129 = math.tanh %128 : vector<16x32xf32>
    %cst_68 = arith.constant 1.000000e+00 : f32
    %130 = vector.broadcast %cst_68 : f32 to vector<16x32xf32>
    %131 = arith.addf %129, %130 : vector<16x32xf32>
    %cst_69 = arith.constant 5.000000e-01 : f32
    %132 = vector.broadcast %cst_69 : f32 to vector<16x32xf32>
    %133 = arith.mulf %132, %131 : vector<16x32xf32>
    %134 = arith.mulf %126, %133 : vector<16x32xf32>
    %135 = arith.addf %96, %134 : vector<16x32xf32>
    %c0_70 = arith.constant 0 : index
    %c0_71 = arith.constant 0 : index
    %136 = vector.load %arg7[%c0_70, %c0_71] : memref<16x32xf32, #tpu.memory_space<vmem>>, vector<16x32xf32>
    tpu.vector_store %arg7[%c0_70, %c0_71], %135 {strides = array<i32>} : memref<16x32xf32, #tpu.memory_space<vmem>>, vector<16x32xf32>,
    return
  }
}

</mosaic_0001>

<llo_original>
// kernel: run_transformer.1
$region0: #{run_transformer.1}
  #allocation0 [shape = 'u32[]', space=smem, size = 0x4, offset = 0x4, fixed_abs, tag = 'smem constant byte address 0x4 - core index']
  #allocation1 [shape = 'u32[144,128]{1,0:T(1,128)}', space=vmem, size = 0x12000, scoped, tag = 'internal scratch']
  %s0 = inlined_call_operand.vmem [shape: f32[16,32], index: 0, kind: input, shape index: {}]
  %s1 = inlined_call_operand.vmem [shape: f32[2,32,32], index: 1, kind: input, shape index: {}]
  %s2 = inlined_call_operand.vmem [shape: f32[2,32,32], index: 2, kind: input, shape index: {}]
  %s3 = inlined_call_operand.vmem [shape: f32[2,32,96], index: 3, kind: input, shape index: {}]
  %s4 = inlined_call_operand.vmem [shape: f32[2,1,96], index: 4, kind: input, shape index: {}]
  %s5 = inlined_call_operand.vmem [shape: f32[2,96,32], index: 5, kind: input, shape index: {}]
  %s6 = inlined_call_operand.vmem [shape: f32[2,1,32], index: 6, kind: input, shape index: {}]
  %s7 = inlined_call_operand.hbm [shape: f32[16,32], index: 7, kind: output, shape index: {}]
  %s8 = sld [smem:[#allocation0]]
  $region38: #{run_transformer.1} parent=0
    _
  %s10 = ssub.s32 1, %s8
  %s11 = scalar_select 0, %s10, %s8
  $region1: #{run_transformer.1} parent=0
    #allocation2 [shape = 'u8[8192]{0}', space=vmem, size = 0x2000, scoped, tag = 'output window, operand 0, single buffered']
    #allocation3 [shape = 's32[1]{0}', space=sflag, size = 0x4, scoped, tag = 'scoped memory for run_transformer.1']
    %12 = vsyncpa [#allocation3], 0
    // Predicated region
    $region2: #{run_transformer.1} parent=1 // pred_check
      _
    $region3: #{run_transformer.1} parent=1 // pred_check_branch
      %14 = sbr.rel (0) target = $region5
    $region4: #{run_transformer.1} parent=1 // pred_region
      _
    $region5: #{run_transformer.1} parent=1 // pred_fallthru
      _
    // Predicated region
    $region6: #{run_transformer.1} parent=1 // pred_check
      _
    $region7: #{run_transformer.1} parent=1 // pred_check_branch
      %16 = sbr.rel (0) target = $region9
    $region8: #{run_transformer.1} parent=1 // pred_region
      _
    $region9: #{run_transformer.1} parent=1 // pred_fallthru
      _
    // Predicated region
    $region10: #{run_transformer.1} parent=1 // pred_check
      _
    $region11: #{run_transformer.1} parent=1 // pred_check_branch
      %18 = sbr.rel (0) target = $region13
    $region12: #{run_transformer.1} parent=1 // pred_region
      _
    $region13: #{run_transformer.1} parent=1 // pred_fallthru
      _
    // Predicated region
    $region14: #{run_transformer.1} parent=1 // pred_check
      _
    $region15: #{run_transformer.1} parent=1 // pred_check_branch
      %20 = sbr.rel (0) target = $region17
    $region16: #{run_transformer.1} parent=1 // pred_region
      _
    $region17: #{run_transformer.1} parent=1 // pred_fallthru
      _
    // Predicated region
    $region18: #{run_transformer.1} parent=1 // pred_check
      _
    $region19: #{run_transformer.1} parent=1 // pred_check_branch
      %22 = sbr.rel (0) target = $region21
    $region20: #{run_transformer.1} parent=1 // pred_region
      _
    $region21: #{run_transformer.1} parent=1 // pred_fallthru
      _
    // Predicated region
    $region22: #{run_transformer.1} parent=1 // pred_check
      _
    $region23: #{run_transformer.1} parent=1 // pred_check_branch
      %24 = sbr.rel (0) target = $region25
    $region24: #{run_transformer.1} parent=1 // pred_region
      _
    $region25: #{run_transformer.1} parent=1 // pred_fallthru
      _
    // Predicated region
    $region26: #{run_transformer.1} parent=1 // pred_check
      _
    $region27: #{run_transformer.1} parent=1 // pred_check_branch
      %26 = sbr.rel (0) target = $region29
    $region28: #{run_transformer.1} parent=1 // pred_region
      _
    $region29: #{run_transformer.1} parent=1 // pred_fallthru
      _
    %v27 = vlaneseq
    %v28 = vshrl.u32 %v27, 7
    %v29 = vadd.s32 %v28, 8
    %v30 = vadd.s32 %v28, 16
    %v31 = vadd.s32 %v28, 24
    %v32 = vshra.s32 %v28, 3
    %v33 = vshra.s32 %v29, 3
    %v34 = vshra.s32 %v30, 3
    %v35 = vshra.s32 %v31, 3
    %v36 = vlaneseq
    %v37 = vand.u32 %v36, 127
    %v38 = vshra.s32 %v37, 3
    %vm39 = vcmp.eq.s32.totalorder %v32, %v38
    %vm40 = vcmp.eq.s32.totalorder %v33, %v38
    %vm41 = vcmp.eq.s32.totalorder %v34, %v38
    %vm42 = vcmp.eq.s32.totalorder %v35, %v38
    %v43 = vsel %vm39, 1, 0
    %v44 = vsel %vm40, 1, 0
    %v45 = vsel %vm41, 1, 0
    %v46 = vsel %vm42, 1, 0
    %v47 = vcvt.s32.f32 %v43
    %v48 = vcvt.s32.f32 %v44
    %v49 = vcvt.s32.f32 %v45
    %v50 = vcvt.s32.f32 %v46
    %v51 = vld [vmem:[%s0] sm:$0xff]
    %v52 = vld [vmem:[%s0 + $0x8] sm:$0xff]
    %v53 = vmul.f32 %v51, %v51
    %v54 = vmul.f32 %v52, %v52
    %vm55 = vcmask 261120
    %v56 = vsel %vm55, %v53, 0.0
    %57 = vadd.xlane.f32.xlu0 %v56
    %v58 = vpop.xlane.xlu0 %57
    %v59 = vsel %vm55, %v54, 0.0
    %60 = vadd.xlane.f32.xlu0 %v59
    %v61 = vpop.xlane.xlu0 %60
    %v62 = vrcp.pop 32.0
    %v63 = vmul.f32 %v58, %v62
    %v64 = vmul.f32 %v61, %v62
    %v65 = vrsqrt.pop %v63
    %v66 = vrsqrt.pop %v64
    %v67 = vmul.f32 %v51, %v65
    %v68 = vmul.f32 %v52, %v66
    %v69 = vld [vmem:[%s1] sm:$0xff]
    %v70 = vld [vmem:[%s1 + $0x8] sm:$0xff]
    %v71 = vld [vmem:[%s1 + $0x10] sm:$0xff]
    %v72 = vld [vmem:[%s1 + $0x18] sm:$0xff]
    %v74 = vsel %vm55, %v67, 0
    %v77 = vsel %vm55, %v68, 0
    %79 = vmatprep.subr.mxu0 0.0
    %80 = vmatpush1.msra.mxu0 %v69
    %81 = vmatprep.subr.mxu0 0.0
    %82 = vmatpush1.msra.mxu0 %v70
    %83 = vmatprep.subr.mxu0 0.0
    %84 = vmatpush1.msra.mxu0 %v71
    %85 = vmatprep.subr.mxu0 0.0
    %86 = vmatpush1.msra.mxu0 %v72
    %87 = vmatprep.subr.mxu0 0.0
    %88 = vmatpush1.msra.mxu0 0.0
    %89 = vmatprep.subr.mxu0 0.0
    %90 = vmatpush1.msra.mxu0 0.0
    %91 = vmatprep.subr.mxu0 0.0
    %92 = vmatpush1.msra.mxu0 0.0
    %93 = vmatprep.subr.mxu0 0.0
    %94 = vmatpush1.msra.mxu0 0.0
    %95 = vmatprep.subr.mxu0 0.0
    %96 = vmatpush1.msra.mxu0 0.0
    %97 = vmatprep.subr.mxu0 0.0
    %98 = vmatpush1.msra.mxu0 0.0
    %99 = vmatprep.subr.mxu0 0.0
    %100 = vmatpush1.msra.mxu0 0.0
    %101 = vmatprep.subr.mxu0 0.0
    %102 = vmatpush1.msra.mxu0 0.0
    %103 = vmatprep.subr.mxu0 0.0
    %104 = vmatpush1.msra.mxu0 0.0
    %105 = vmatprep.subr.mxu0 0.0
    %106 = vmatpush1.msra.mxu0 0.0
    %107 = vmatprep.subr.mxu0 0.0
    %108 = vmatpush1.msra.mxu0 0.0
    %109 = vmatprep.subr.mxu0 0.0
    %110 = vmatpush1.msra.mxu0 0.0
    %111 = vmatprep.subr.mxu0 0.0
    %112 = vmatpush1.msra.mxu0 0.0
    %113 = vmatprep.subr.mxu0 0.0
    %114 = vmatpush1.msra.mxu0 0.0
    %115 = vmatprep.subr.mxu0 0.0
    %116 = vmatpush1.msra.mxu0 0.0
    %117 = vmatprep.subr.mxu0 0.0
    %118 = vmatpush1.msra.mxu0 0.0
    %119 = vmatprep.subr.mxu0 0.0
    %120 = vmatpush1.msra.mxu0 0.0
    %121 = vmatprep.subr.mxu0 0.0
    %122 = vmatpush1.msra.mxu0 0.0
    %123 = vmatprep.subr.mxu0 0.0
    %124 = vmatpush1.msra.mxu0 0.0
    %125 = vmatprep.subr.mxu0 0.0
    %126 = vmatpush1.msra.mxu0 0.0
    %127 = vmatprep.subr.mxu0 0.0
    %128 = vmatpush1.msra.mxu0 0.0
    %129 = vmatprep.subr.mxu0 0.0
    %130 = vmatpush1.msra.mxu0 0.0
    %131 = vmatprep.subr.mxu0 0.0
    %132 = vmatpush1.msra.mxu0 0.0
    %133 = vmatprep.subr.mxu0 0.0
    %134 = vmatpush1.msra.mxu0 0.0
    %135 = vmatprep.subr.mxu0 0.0
    %136 = vmatpush1.msra.mxu0 0.0
    %137 = vmatprep.subr.mxu0 0.0
    %138 = vmatpush1.msra.mxu0 0.0
    %139 = vmatprep.subr.mxu0 0.0
    %140 = vmatpush1.msra.mxu0 0.0
    %141 = vmatprep.subr.mxu0 0.0
    %142 = vmatpush1.msra.mxu0 0.0
    %143 = vmatprep.mubr.f32.mxu0 0.0
    %144 = vmatmul.mubr.f32.gmra.mrb[0].mxu0 %v74
    %v145 = vpop.f32.mrb[0].mxu0
    %v146 = vadd.f32 0.0, %v145
    %v147 = vpop.f32.mrb[0].mxu0
    %148 = vmatprep.mubr.f32.mxu0 0.0
    %149 = vmatmul.mubr.f32.gmra.mrb[0].mxu0 %v77
    %v150 = vpop.f32.mrb[0].mxu0
    %v151 = vadd.f32 0.0, %v150
    %v152 = vpop.f32.mrb[0].mxu0
    %153 = vdwg.mxu0
    %v154 = vsel %vm55, %v146, -inf
    %155 = vmax.xlane.f32.xlu0 %v154
    %v156 = vpop.xlane.xlu0 %155
    %v157 = vsel %vm55, %v151, -inf
    %158 = vmax.xlane.f32.xlu0 %v157
    %v159 = vpop.xlane.xlu0 %158
    %v160 = vsub.f32 %v146, %v156
    %v161 = vsub.f32 %v151, %v159
    %v162 = vmul.f32 %v160, 1.442695
    %v163 = vpow.pop %v162
    %v164 = vmul.f32 %v161, 1.442695
    %v165 = vpow.pop %v164
    %v167 = vsel %vm55, %v163, 0
    %v170 = vsel %vm55, %v165, 0
    %172 = vmatprep.subr.mxu0 0.0
    %173 = vmatpush1.msra.mxu0 %v47
    %174 = vmatprep.subr.mxu0 0.0
    %175 = vmatpush1.msra.mxu0 %v48
    %176 = vmatprep.subr.mxu0 0.0
    %177 = vmatpush1.msra.mxu0 %v49
    %178 = vmatprep.subr.mxu0 0.0
    %179 = vmatpush1.msra.mxu0 %v50
    %180 = vmatprep.subr.mxu0 0.0
    %181 = vmatpush1.msra.mxu0 0.0
    %182 = vmatprep.subr.mxu0 0.0
    %183 = vmatpush1.msra.mxu0 0.0
    %184 = vmatprep.subr.mxu0 0.0
    %185 = vmatpush1.msra.mxu0 0.0
    %186 = vmatprep.subr.mxu0 0.0
    %187 = vmatpush1.msra.mxu0 0.0
    %188 = vmatprep.subr.mxu0 0.0
    %189 = vmatpush1.msra.mxu0 0.0
    %190 = vmatprep.subr.mxu0 0.0
    %191 = vmatpush1.msra.mxu0 0.0
    %192 = vmatprep.subr.mxu0 0.0
    %193 = vmatpush1.msra.mxu0 0.0
    %194 = vmatprep.subr.mxu0 0.0
    %195 = vmatpush1.msra.mxu0 0.0
    %196 = vmatprep.subr.mxu0 0.0
    %197 = vmatpush1.msra.mxu0 0.0
    %198 = vmatprep.subr.mxu0 0.0
    %199 = vmatpush1.msra.mxu0 0.0
    %200 = vmatprep.subr.mxu0 0.0
    %201 = vmatpush1.msra.mxu0 0.0
    %202 = vmatprep.subr.mxu0 0.0
    %203 = vmatpush1.msra.mxu0 0.0
    %204 = vmatprep.subr.mxu0 0.0
    %205 = vmatpush1.msra.mxu0 0.0
    %206 = vmatprep.subr.mxu0 0.0
    %207 = vmatpush1.msra.mxu0 0.0
    %208 = vmatprep.subr.mxu0 0.0
    %209 = vmatpush1.msra.mxu0 0.0
    %210 = vmatprep.subr.mxu0 0.0
    %211 = vmatpush1.msra.mxu0 0.0
    %212 = vmatprep.subr.mxu0 0.0
    %213 = vmatpush1.msra.mxu0 0.0
    %214 = vmatprep.subr.mxu0 0.0
    %215 = vmatpush1.msra.mxu0 0.0
    %216 = vmatprep.subr.mxu0 0.0
    %217 = vmatpush1.msra.mxu0 0.0
    %218 = vmatprep.subr.mxu0 0.0
    %219 = vmatpush1.msra.mxu0 0.0
    %220 = vmatprep.subr.mxu0 0.0
    %221 = vmatpush1.msra.mxu0 0.0
    %222 = vmatprep.subr.mxu0 0.0
    %223 = vmatpush1.msra.mxu0 0.0
    %224 = vmatprep.subr.mxu0 0.0
    %225 = vmatpush1.msra.mxu0 0.0
    %226 = vmatprep.subr.mxu0 0.0
    %227 = vmatpush1.msra.mxu0 0.0
    %228 = vmatprep.subr.mxu0 0.0
    %229 = vmatpush1.msra.mxu0 0.0
    %230 = vmatprep.subr.mxu0 0.0
    %231 = vmatpush1.msra.mxu0 0.0
    %232 = vmatprep.subr.mxu0 0.0
    %233 = vmatpush1.msra.mxu0 0.0
    %234 = vmatprep.subr.mxu0 0.0
    %235 = vmatpush1.msra.mxu0 0.0
    %236 = vmatprep.mubr.f32.mxu0 0.0
    %237 = vmatmul.mubr.f32.gmra.mrb[0].mxu0 %v167
    %v238 = vpop.f32.mrb[0].mxu0
    %v239 = vadd.f32 0.0, %v238
    %v240 = vpop.f32.mrb[0].mxu0
    %241 = vmatprep.mubr.f32.mxu0 0.0
    %242 = vmatmul.mubr.f32.gmra.mrb[0].mxu0 %v170
    %v243 = vpop.f32.mrb[0].mxu0
    %v244 = vadd.f32 0.0, %v243
    %v245 = vpop.f32.mrb[0].mxu0
    %246 = vdwg.mxu0
    %v247 = vrcp.pop %v239
    %v248 = vmul.f32 1.0, %v247
    %v249 = vrcp.pop %v244
    %v250 = vmul.f32 1.0, %v249
    %v251 = vmul.f32 %v163, %v248
    %v252 = vmul.f32 %v165, %v250
    %v253 = vld [vmem:[%s2] sm:$0xff]
    %v254 = vld [vmem:[%s2 + $0x8] sm:$0xff]
    %v255 = vld [vmem:[%s2 + $0x10] sm:$0xff]
    %v256 = vld [vmem:[%s2 + $0x18] sm:$0xff]
    %v258 = vsel %vm55, %v251, 0
    %v261 = vsel %vm55, %v252, 0
    %263 = vmatprep.subr.mxu0 0.0
    %264 = vmatpush1.msra.mxu0 %v253
    %265 = vmatprep.subr.mxu0 0.0
    %266 = vmatpush1.msra.mxu0 %v254
    %267 = vmatprep.subr.mxu0 0.0
    %268 = vmatpush1.msra.mxu0 %v255
    %269 = vmatprep.subr.mxu0 0.0
    %270 = vmatpush1.msra.mxu0 %v256
    %271 = vmatprep.subr.mxu0 0.0
    %272 = vmatpush1.msra.mxu0 0.0
    %273 = vmatprep.subr.mxu0 0.0
    %274 = vmatpush1.msra.mxu0 0.0
    %275 = vmatprep.subr.mxu0 0.0
    %276 = vmatpush1.msra.mxu0 0.0
    %277 = vmatprep.subr.mxu0 0.0
    %278 = vmatpush1.msra.mxu0 0.0
    %279 = vmatprep.subr.mxu0 0.0
    %280 = vmatpush1.msra.mxu0 0.0
    %281 = vmatprep.subr.mxu0 0.0
    %282 = vmatpush1.msra.mxu0 0.0
    %283 = vmatprep.subr.mxu0 0.0
    %284 = vmatpush1.msra.mxu0 0.0
    %285 = vmatprep.subr.mxu0 0.0
    %286 = vmatpush1.msra.mxu0 0.0
    %287 = vmatprep.subr.mxu0 0.0
    %288 = vmatpush1.msra.mxu0 0.0
    %289 = vmatprep.subr.mxu0 0.0
    %290 = vmatpush1.msra.mxu0 0.0
    %291 = vmatprep.subr.mxu0 0.0
    %292 = vmatpush1.msra.mxu0 0.0
    %293 = vmatprep.subr.mxu0 0.0
    %294 = vmatpush1.msra.mxu0 0.0
    %295 = vmatprep.subr.mxu0 0.0
    %296 = vmatpush1.msra.mxu0 0.0
    %297 = vmatprep.subr.mxu0 0.0
    %298 = vmatpush1.msra.mxu0 0.0
    %299 = vmatprep.subr.mxu0 0.0
    %300 = vmatpush1.msra.mxu0 0.0
    %301 = vmatprep.subr.mxu0 0.0
    %302 = vmatpush1.msra.mxu0 0.0
    %303 = vmatprep.subr.mxu0 0.0
    %304 = vmatpush1.msra.mxu0 0.0
    %305 = vmatprep.subr.mxu0 0.0
    %306 = vmatpush1.msra.mxu0 0.0
    %307 = vmatprep.subr.mxu0 0.0
    %308 = vmatpush1.msra.mxu0 0.0
    %309 = vmatprep.subr.mxu0 0.0
    %310 = vmatpush1.msra.mxu0 0.0
    %311 = vmatprep.subr.mxu0 0.0
    %312 = vmatpush1.msra.mxu0 0.0
    %313 = vmatprep.subr.mxu0 0.0
    %314 = vmatpush1.msra.mxu0 0.0
    %315 = vmatprep.subr.mxu0 0.0
    %316 = vmatpush1.msra.mxu0 0.0
    %317 = vmatprep.subr.mxu0 0.0
    %318 = vmatpush1.msra.mxu0 0.0
    %319 = vmatprep.subr.mxu0 0.0
    %320 = vmatpush1.msra.mxu0 0.0
    %321 = vmatprep.subr.mxu0 0.0
    %322 = vmatpush1.msra.mxu0 0.0
    %323 = vmatprep.subr.mxu0 0.0
    %324 = vmatpush1.msra.mxu0 0.0
    %325 = vmatprep.subr.mxu0 0.0
    %326 = vmatpush1.msra.mxu0 0.0
    %327 = vmatprep.mubr.f32.mxu0 0.0
    %328 = vmatmul.mubr.f32.gmra.mrb[0].mxu0 %v258
    %v329 = vpop.f32.mrb[0].mxu0
    %v330 = vadd.f32 0.0, %v329
    %v331 = vpop.f32.mrb[0].mxu0
    %332 = vmatprep.mubr.f32.mxu0 0.0
    %333 = vmatmul.mubr.f32.gmra.mrb[0].mxu0 %v261
    %v334 = vpop.f32.mrb[0].mxu0
    %v335 = vadd.f32 0.0, %v334
    %v336 = vpop.f32.mrb[0].mxu0
    %337 = vdwg.mxu0
    %v338 = vadd.f32 %v51, %v330
    %v339 = vadd.f32 %v52, %v335
    %v340 = vmul.f32 %v338, %v338
    %v341 = vmul.f32 %v339, %v339
    %v342 = vsel %vm55, %v340, 0.0
    %343 = vadd.xlane.f32.xlu0 %v342
    %v344 = vpop.xlane.xlu0 %343
    %v345 = vsel %vm55, %v341, 0.0
    %346 = vadd.xlane.f32.xlu0 %v345
    %v347 = vpop.xlane.xlu0 %346
    %v348 = vmul.f32 %v344, %v62
    %v349 = vmul.f32 %v347, %v62
    %v350 = vrsqrt.pop %v348
    %v351 = vrsqrt.pop %v349
    %v352 = vmul.f32 %v338, %v350
    %v353 = vmul.f32 %v339, %v351
    %v354 = vld [vmem:[%s3] sm:$0xff]
    %v355 = vld [vmem:[%s3 + $0x8] sm:$0xff]
    %v356 = vld [vmem:[%s3 + $0x10] sm:$0xff]
    %v357 = vld [vmem:[%s3 + $0x18] sm:$0xff]
    %v358 = vld [vmem:[%s4] sm:$0x1]
    %v360 = vlaneseq
    %v361 = vshrl.u32 %v360, 7
    %v362 = vsub.s32 0, %v361
    %v363 = vrot.slane %v358, %v362
    %v366 = vsel %vm55, %v352, 0
    %v369 = vsel %vm55, %v353, 0
    %371 = vmatprep.subr.mxu0 0.0
    %372 = vmatpush1.msra.mxu0 %v354
    %373 = vmatprep.subr.mxu0 0.0
    %374 = vmatpush1.msra.mxu0 %v355
    %375 = vmatprep.subr.mxu0 0.0
    %376 = vmatpush1.msra.mxu0 %v356
    %377 = vmatprep.subr.mxu0 0.0
    %378 = vmatpush1.msra.mxu0 %v357
    %379 = vmatprep.subr.mxu0 0.0
    %380 = vmatpush1.msra.mxu0 0.0
    %381 = vmatprep.subr.mxu0 0.0
    %382 = vmatpush1.msra.mxu0 0.0
    %383 = vmatprep.subr.mxu0 0.0
    %384 = vmatpush1.msra.mxu0 0.0
    %385 = vmatprep.subr.mxu0 0.0
    %386 = vmatpush1.msra.mxu0 0.0
    %387 = vmatprep.subr.mxu0 0.0
    %388 = vmatpush1.msra.mxu0 0.0
    %389 = vmatprep.subr.mxu0 0.0
    %390 = vmatpush1.msra.mxu0 0.0
    %391 = vmatprep.subr.mxu0 0.0
    %392 = vmatpush1.msra.mxu0 0.0
    %393 = vmatprep.subr.mxu0 0.0
    %394 = vmatpush1.msra.mxu0 0.0
    %395 = vmatprep.subr.mxu0 0.0
    %396 = vmatpush1.msra.mxu0 0.0
    %397 = vmatprep.subr.mxu0 0.0
    %398 = vmatpush1.msra.mxu0 0.0
    %399 = vmatprep.subr.mxu0 0.0
    %400 = vmatpush1.msra.mxu0 0.0
    %401 = vmatprep.subr.mxu0 0.0
    %402 = vmatpush1.msra.mxu0 0.0
    %403 = vmatprep.subr.mxu0 0.0
    %404 = vmatpush1.msra.mxu0 0.0
    %405 = vmatprep.subr.mxu0 0.0
    %406 = vmatpush1.msra.mxu0 0.0
    %407 = vmatprep.subr.mxu0 0.0
    %408 = vmatpush1.msra.mxu0 0.0
    %409 = vmatprep.subr.mxu0 0.0
    %410 = vmatpush1.msra.mxu0 0.0
    %411 = vmatprep.subr.mxu0 0.0
    %412 = vmatpush1.msra.mxu0 0.0
    %413 = vmatprep.subr.mxu0 0.0
    %414 = vmatpush1.msra.mxu0 0.0
    %415 = vmatprep.subr.mxu0 0.0
    %416 = vmatpush1.msra.mxu0 0.0
    %417 = vmatprep.subr.mxu0 0.0
    %418 = vmatpush1.msra.mxu0 0.0
    %419 = vmatprep.subr.mxu0 0.0
    %420 = vmatpush1.msra.mxu0 0.0
    %421 = vmatprep.subr.mxu0 0.0
    %422 = vmatpush1.msra.mxu0 0.0
    %423 = vmatprep.subr.mxu0 0.0
    %424 = vmatpush1.msra.mxu0 0.0
    %425 = vmatprep.subr.mxu0 0.0
    %426 = vmatpush1.msra.mxu0 0.0
    %427 = vmatprep.subr.mxu0 0.0
    %428 = vmatpush1.msra.mxu0 0.0
    %429 = vmatprep.subr.mxu0 0.0
    %430 = vmatpush1.msra.mxu0 0.0
    %431 = vmatprep.subr.mxu0 0.0
    %432 = vmatpush1.msra.mxu0 0.0
    %433 = vmatprep.subr.mxu0 0.0
    %434 = vmatpush1.msra.mxu0 0.0
    %435 = vmatprep.mubr.f32.mxu0 0.0
    %436 = vmatmul.mubr.f32.gmra.mrb[0].mxu0 %v366
    %v437 = vpop.f32.mrb[0].mxu0
    %v438 = vadd.f32 %v363, %v437
    %v439 = vpop.f32.mrb[0].mxu0
    %440 = vmatprep.mubr.f32.mxu0 0.0
    %441 = vmatmul.mubr.f32.gmra.mrb[0].mxu0 %v369
    %v442 = vpop.f32.mrb[0].mxu0
    %v443 = vadd.f32 %v363, %v442
    %v444 = vpop.f32.mrb[0].mxu0
    %445 = vdwg.mxu0
    %v446 = vmul.f32 %v438, 0.5
    %v447 = vmul.f32 %v443, 0.5
    %v448 = vtanh.pop %v446
    %v449 = vtanh.pop %v447
    %v450 = vadd.f32 %v448, 1.0
    %v451 = vadd.f32 %v449, 1.0
    %v452 = vmul.f32 %v450, 0.5
    %v453 = vmul.f32 %v451, 0.5
    %v454 = vmul.f32 %v438, %v452
    %v455 = vmul.f32 %v443, %v453
    %v456 = vld [vmem:[%s5] sm:$0xff]
    %v457 = vld [vmem:[%s5 + $0x8] sm:$0xff]
    %v458 = vld [vmem:[%s5 + $0x10] sm:$0xff]
    %v459 = vld [vmem:[%s5 + $0x18] sm:$0xff]
    %v460 = vld [vmem:[%s5 + $0x20] sm:$0xff]
    %v461 = vld [vmem:[%s5 + $0x28] sm:$0xff]
    %v462 = vld [vmem:[%s5 + $0x30] sm:$0xff]
    %v463 = vld [vmem:[%s5 + $0x38] sm:$0xff]
    %v464 = vld [vmem:[%s5 + $0x40] sm:$0xff]
    %v465 = vld [vmem:[%s5 + $0x48] sm:$0xff]
    %v466 = vld [vmem:[%s5 + $0x50] sm:$0xff]
    %v467 = vld [vmem:[%s5 + $0x58] sm:$0xff]
    %v468 = vld [vmem:[%s6] sm:$0x1]
    %v470 = vlaneseq
    %v471 = vshrl.u32 %v470, 7
    %v472 = vsub.s32 0, %v471
    %v473 = vrot.slane %v468, %v472
    %vm475 = vcmask 785408
    %v477 = vsel %vm475, %v454, 0
    %v480 = vsel %vm475, %v455, 0
    %482 = vmatprep.subr.mxu0 0.0
    %483 = vmatpush1.msra.mxu0 %v456
    %484 = vmatprep.subr.mxu0 0.0
    %485 = vmatpush1.msra.mxu0 %v457
    %486 = vmatprep.subr.mxu0 0.0
    %487 = vmatpush1.msra.mxu0 %v458
    %488 = vmatprep.subr.mxu0 0.0
    %489 = vmatpush1.msra.mxu0 %v459
    %490 = vmatprep.subr.mxu0 0.0
    %491 = vmatpush1.msra.mxu0 %v460
    %492 = vmatprep.subr.mxu0 0.0
    %493 = vmatpush1.msra.mxu0 %v461
    %494 = vmatprep.subr.mxu0 0.0
    %495 = vmatpush1.msra.mxu0 %v462
    %496 = vmatprep.subr.mxu0 0.0
    %497 = vmatpush1.msra.mxu0 %v463
    %498 = vmatprep.subr.mxu0 0.0
    %499 = vmatpush1.msra.mxu0 %v464
    %500 = vmatprep.subr.mxu0 0.0
    %501 = vmatpush1.msra.mxu0 %v465
    %502 = vmatprep.subr.mxu0 0.0
    %503 = vmatpush1.msra.mxu0 %v466
    %504 = vmatprep.subr.mxu0 0.0
    %505 = vmatpush1.msra.mxu0 %v467
    %506 = vmatprep.subr.mxu0 0.0
    %507 = vmatpush1.msra.mxu0 0.0
    %508 = vmatprep.subr.mxu0 0.0
    %509 = vmatpush1.msra.mxu0 0.0
    %510 = vmatprep.subr.mxu0 0.0
    %511 = vmatpush1.msra.mxu0 0.0
    %512 = vmatprep.subr.mxu0 0.0
    %513 = vmatpush1.msra.mxu0 0.0
    %514 = vmatprep.subr.mxu0 0.0
    %515 = vmatpush1.msra.mxu0 0.0
    %516 = vmatprep.subr.mxu0 0.0
    %517 = vmatpush1.msra.mxu0 0.0
    %518 = vmatprep.subr.mxu0 0.0
    %519 = vmatpush1.msra.mxu0 0.0
    %520 = vmatprep.subr.mxu0 0.0
    %521 = vmatpush1.msra.mxu0 0.0
    %522 = vmatprep.subr.mxu0 0.0
    %523 = vmatpush1.msra.mxu0 0.0
    %524 = vmatprep.subr.mxu0 0.0
    %525 = vmatpush1.msra.mxu0 0.0
    %526 = vmatprep.subr.mxu0 0.0
    %527 = vmatpush1.msra.mxu0 0.0
    %528 = vmatprep.subr.mxu0 0.0
    %529 = vmatpush1.msra.mxu0 0.0
    %530 = vmatprep.subr.mxu0 0.0
    %531 = vmatpush1.msra.mxu0 0.0
    %532 = vmatprep.subr.mxu0 0.0
    %533 = vmatpush1.msra.mxu0 0.0
    %534 = vmatprep.subr.mxu0 0.0
    %535 = vmatpush1.msra.mxu0 0.0
    %536 = vmatprep.subr.mxu0 0.0
    %537 = vmatpush1.msra.mxu0 0.0
    %538 = vmatprep.subr.mxu0 0.0
    %539 = vmatpush1.msra.mxu0 0.0
    %540 = vmatprep.subr.mxu0 0.0
    %541 = vmatpush1.msra.mxu0 0.0
    %542 = vmatprep.subr.mxu0 0.0
    %543 = vmatpush1.msra.mxu0 0.0
    %544 = vmatprep.subr.mxu0 0.0
    %545 = vmatpush1.msra.mxu0 0.0
    %546 = vmatprep.mubr.f32.mxu0 0.0
    %547 = vmatmul.mubr.f32.gmra.mrb[0].mxu0 %v477
    %v548 = vpop.f32.mrb[0].mxu0
    %v549 = vadd.f32 %v473, %v548
    %v550 = vpop.f32.mrb[0].mxu0
    %551 = vmatprep.mubr.f32.mxu0 0.0
    %552 = vmatmul.mubr.f32.gmra.mrb[0].mxu0 %v480
    %v553 = vpop.f32.mrb[0].mxu0
    %v554 = vadd.f32 %v473, %v553
    %v555 = vpop.f32.mrb[0].mxu0
    %556 = vdwg.mxu0
    %v557 = vmul.f32 %v549, 0.5
    %v558 = vmul.f32 %v554, 0.5
    %v559 = vtanh.pop %v557
    %v560 = vtanh.pop %v558
    %v561 = vadd.f32 %v559, 1.0
    %v562 = vadd.f32 %v560, 1.0
    %v563 = vmul.f32 %v561, 0.5
    %v564 = vmul.f32 %v562, 0.5
    %v565 = vmul.f32 %v549, %v563
    %v566 = vmul.f32 %v554, %v564
    %v567 = vadd.f32 %v338, %v565
    %v568 = vadd.f32 %v339, %v566
    %v569 = vmul.f32 %v567, %v567
    %v570 = vmul.f32 %v568, %v568
    %v571 = vsel %vm55, %v569, 0.0
    %572 = vadd.xlane.f32.xlu0 %v571
    %v573 = vpop.xlane.xlu0 %572
    %v574 = vsel %vm55, %v570, 0.0
    %575 = vadd.xlane.f32.xlu0 %v574
    %v576 = vpop.xlane.xlu0 %575
    %v577 = vmul.f32 %v573, %v62
    %v578 = vmul.f32 %v576, %v62
    %v579 = vrsqrt.pop %v577
    %v580 = vrsqrt.pop %v578
    %v581 = vmul.f32 %v567, %v579
    %v582 = vmul.f32 %v568, %v580
    %s583 = scalar_lea.vmem %s1, 32
    %v584 = vld [vmem:[%s583] sm:$0xff]
    %v585 = vld [vmem:[%s583 + $0x8] sm:$0xff]
    %v586 = vld [vmem:[%s583 + $0x10] sm:$0xff]
    %v587 = vld [vmem:[%s583 + $0x18] sm:$0xff]
    %v589 = vsel %vm55, %v581, 0
    %v592 = vsel %vm55, %v582, 0
    %594 = vmatprep.subr.mxu0 0.0
    %595 = vmatpush1.msra.mxu0 %v584
    %596 = vmatprep.subr.mxu0 0.0
    %597 = vmatpush1.msra.mxu0 %v585
    %598 = vmatprep.subr.mxu0 0.0
    %599 = vmatpush1.msra.mxu0 %v586
    %600 = vmatprep.subr.mxu0 0.0
    %601 = vmatpush1.msra.mxu0 %v587
    %602 = vmatprep.subr.mxu0 0.0
    %603 = vmatpush1.msra.mxu0 0.0
    %604 = vmatprep.subr.mxu0 0.0
    %605 = vmatpush1.msra.mxu0 0.0
    %606 = vmatprep.subr.mxu0 0.0
    %607 = vmatpush1.msra.mxu0 0.0
    %608 = vmatprep.subr.mxu0 0.0
    %609 = vmatpush1.msra.mxu0 0.0
    %610 = vmatprep.subr.mxu0 0.0
    %611 = vmatpush1.msra.mxu0 0.0
    %612 = vmatprep.subr.mxu0 0.0
    %613 = vmatpush1.msra.mxu0 0.0
    %614 = vmatprep.subr.mxu0 0.0
    %615 = vmatpush1.msra.mxu0 0.0
    %616 = vmatprep.subr.mxu0 0.0
    %617 = vmatpush1.msra.mxu0 0.0
    %618 = vmatprep.subr.mxu0 0.0
    %619 = vmatpush1.msra.mxu0 0.0
    %620 = vmatprep.subr.mxu0 0.0
    %621 = vmatpush1.msra.mxu0 0.0
    %622 = vmatprep.subr.mxu0 0.0
    %623 = vmatpush1.msra.mxu0 0.0
    %624 = vmatprep.subr.mxu0 0.0
    %625 = vmatpush1.msra.mxu0 0.0
    %626 = vmatprep.subr.mxu0 0.0
    %627 = vmatpush1.msra.mxu0 0.0
    %628 = vmatprep.subr.mxu0 0.0
    %629 = vmatpush1.msra.mxu0 0.0
    %630 = vmatprep.subr.mxu0 0.0
    %631 = vmatpush1.msra.mxu0 0.0
    %632 = vmatprep.subr.mxu0 0.0
    %633 = vmatpush1.msra.mxu0 0.0
    %634 = vmatprep.subr.mxu0 0.0
    %635 = vmatpush1.msra.mxu0 0.0
    %636 = vmatprep.subr.mxu0 0.0
    %637 = vmatpush1.msra.mxu0 0.0
    %638 = vmatprep.subr.mxu0 0.0
    %639 = vmatpush1.msra.mxu0 0.0
    %640 = vmatprep.subr.mxu0 0.0
    %641 = vmatpush1.msra.mxu0 0.0
    %642 = vmatprep.subr.mxu0 0.0
    %643 = vmatpush1.msra.mxu0 0.0
    %644 = vmatprep.subr.mxu0 0.0
    %645 = vmatpush1.msra.mxu0 0.0
    %646 = vmatprep.subr.mxu0 0.0
    %647 = vmatpush1.msra.mxu0 0.0
    %648 = vmatprep.subr.mxu0 0.0
    %649 = vmatpush1.msra.mxu0 0.0
    %650 = vmatprep.subr.mxu0 0.0
    %651 = vmatpush1.msra.mxu0 0.0
    %652 = vmatprep.subr.mxu0 0.0
    %653 = vmatpush1.msra.mxu0 0.0
    %654 = vmatprep.subr.mxu0 0.0
    %655 = vmatpush1.msra.mxu0 0.0
    %656 = vmatprep.subr.mxu0 0.0
    %657 = vmatpush1.msra.mxu0 0.0
    %658 = vmatprep.mubr.f32.mxu0 0.0
    %659 = vmatmul.mubr.f32.gmra.mrb[0].mxu0 %v589
    %v660 = vpop.f32.mrb[0].mxu0
    %v661 = vadd.f32 0.0, %v660
    %v662 = vpop.f32.mrb[0].mxu0
    %663 = vmatprep.mubr.f32.mxu0 0.0
    %664 = vmatmul.mubr.f32.gmra.mrb[0].mxu0 %v592
    %v665 = vpop.f32.mrb[0].mxu0
    %v666 = vadd.f32 0.0, %v665
    %v667 = vpop.f32.mrb[0].mxu0
    %668 = vdwg.mxu0
    %v669 = vsel %vm55, %v661, -inf
    %670 = vmax.xlane.f32.xlu0 %v669
    %v671 = vpop.xlane.xlu0 %670
    %v672 = vsel %vm55, %v666, -inf
    %673 = vmax.xlane.f32.xlu0 %v672
    %v674 = vpop.xlane.xlu0 %673
    %v675 = vsub.f32 %v661, %v671
    %v676 = vsub.f32 %v666, %v674
    %v677 = vmul.f32 %v675, 1.442695
    %v678 = vpow.pop %v677
    %v679 = vmul.f32 %v676, 1.442695
    %v680 = vpow.pop %v679
    %v682 = vsel %vm55, %v678, 0
    %v685 = vsel %vm55, %v680, 0
    %687 = vmatprep.subr.mxu0 0.0
    %688 = vmatpush1.msra.mxu0 %v47
    %689 = vmatprep.subr.mxu0 0.0
    %690 = vmatpush1.msra.mxu0 %v48
    %691 = vmatprep.subr.mxu0 0.0
    %692 = vmatpush1.msra.mxu0 %v49
    %693 = vmatprep.subr.mxu0 0.0
    %694 = vmatpush1.msra.mxu0 %v50
    %695 = vmatprep.subr.mxu0 0.0
    %696 = vmatpush1.msra.mxu0 0.0
    %697 = vmatprep.subr.mxu0 0.0
    %698 = vmatpush1.msra.mxu0 0.0
    %699 = vmatprep.subr.mxu0 0.0
    %700 = vmatpush1.msra.mxu0 0.0
    %701 = vmatprep.subr.mxu0 0.0
    %702 = vmatpush1.msra.mxu0 0.0
    %703 = vmatprep.subr.mxu0 0.0
    %704 = vmatpush1.msra.mxu0 0.0
    %705 = vmatprep.subr.mxu0 0.0
    %706 = vmatpush1.msra.mxu0 0.0
    %707 = vmatprep.subr.mxu0 0.0
    %708 = vmatpush1.msra.mxu0 0.0
    %709 = vmatprep.subr.mxu0 0.0
    %710 = vmatpush1.msra.mxu0 0.0
    %711 = vmatprep.subr.mxu0 0.0
    %712 = vmatpush1.msra.mxu0 0.0
    %713 = vmatprep.subr.mxu0 0.0
    %714 = vmatpush1.msra.mxu0 0.0
    %715 = vmatprep.subr.mxu0 0.0
    %716 = vmatpush1.msra.mxu0 0.0
    %717 = vmatprep.subr.mxu0 0.0
    %718 = vmatpush1.msra.mxu0 0.0
    %719 = vmatprep.subr.mxu0 0.0
    %720 = vmatpush1.msra.mxu0 0.0
    %721 = vmatprep.subr.mxu0 0.0
    %722 = vmatpush1.msra.mxu0 0.0
    %723 = vmatprep.subr.mxu0 0.0
    %724 = vmatpush1.msra.mxu0 0.0
    %725 = vmatprep.subr.mxu0 0.0
    %726 = vmatpush1.msra.mxu0 0.0
    %727 = vmatprep.subr.mxu0 0.0
    %728 = vmatpush1.msra.mxu0 0.0
    %729 = vmatprep.subr.mxu0 0.0
    %730 = vmatpush1.msra.mxu0 0.0
    %731 = vmatprep.subr.mxu0 0.0
    %732 = vmatpush1.msra.mxu0 0.0
    %733 = vmatprep.subr.mxu0 0.0
    %734 = vmatpush1.msra.mxu0 0.0
    %735 = vmatprep.subr.mxu0 0.0
    %736 = vmatpush1.msra.mxu0 0.0
    %737 = vmatprep.subr.mxu0 0.0
    %738 = vmatpush1.msra.mxu0 0.0
    %739 = vmatprep.subr.mxu0 0.0
    %740 = vmatpush1.msra.mxu0 0.0
    %741 = vmatprep.subr.mxu0 0.0
    %742 = vmatpush1.msra.mxu0 0.0
    %743 = vmatprep.subr.mxu0 0.0
    %744 = vmatpush1.msra.mxu0 0.0
    %745 = vmatprep.subr.mxu0 0.0
    %746 = vmatpush1.msra.mxu0 0.0
    %747 = vmatprep.subr.mxu0 0.0
    %748 = vmatpush1.msra.mxu0 0.0
    %749 = vmatprep.subr.mxu0 0.0
    %750 = vmatpush1.msra.mxu0 0.0
    %751 = vmatprep.mubr.f32.mxu0 0.0
    %752 = vmatmul.mubr.f32.gmra.mrb[0].mxu0 %v682
    %v753 = vpop.f32.mrb[0].mxu0
    %v754 = vadd.f32 0.0, %v753
    %v755 = vpop.f32.mrb[0].mxu0
    %756 = vmatprep.mubr.f32.mxu0 0.0
    %757 = vmatmul.mubr.f32.gmra.mrb[0].mxu0 %v685
    %v758 = vpop.f32.mrb[0].mxu0
    %v759 = vadd.f32 0.0, %v758
    %v760 = vpop.f32.mrb[0].mxu0
    %761 = vdwg.mxu0
    %v762 = vrcp.pop %v754
    %v763 = vmul.f32 1.0, %v762
    %v764 = vrcp.pop %v759
    %v765 = vmul.f32 1.0, %v764
    %v766 = vmul.f32 %v678, %v763
    %v767 = vmul.f32 %v680, %v765
    %s768 = scalar_lea.vmem %s2, 32
    %v769 = vld [vmem:[%s768] sm:$0xff]
    %v770 = vld [vmem:[%s768 + $0x8] sm:$0xff]
    %v771 = vld [vmem:[%s768 + $0x10] sm:$0xff]
    %v772 = vld [vmem:[%s768 + $0x18] sm:$0xff]
    %v774 = vsel %vm55, %v766, 0
    %v777 = vsel %vm55, %v767, 0
    %779 = vmatprep.subr.mxu0 0.0
    %780 = vmatpush1.msra.mxu0 %v769
    %781 = vmatprep.subr.mxu0 0.0
    %782 = vmatpush1.msra.mxu0 %v770
    %783 = vmatprep.subr.mxu0 0.0
    %784 = vmatpush1.msra.mxu0 %v771
    %785 = vmatprep.subr.mxu0 0.0
    %786 = vmatpush1.msra.mxu0 %v772
    %787 = vmatprep.subr.mxu0 0.0
    %788 = vmatpush1.msra.mxu0 0.0
    %789 = vmatprep.subr.mxu0 0.0
    %790 = vmatpush1.msra.mxu0 0.0
    %791 = vmatprep.subr.mxu0 0.0
    %792 = vmatpush1.msra.mxu0 0.0
    %793 = vmatprep.subr.mxu0 0.0
    %794 = vmatpush1.msra.mxu0 0.0
    %795 = vmatprep.subr.mxu0 0.0
    %796 = vmatpush1.msra.mxu0 0.0
    %797 = vmatprep.subr.mxu0 0.0
    %798 = vmatpush1.msra.mxu0 0.0
    %799 = vmatprep.subr.mxu0 0.0
    %800 = vmatpush1.msra.mxu0 0.0
    %801 = vmatprep.subr.mxu0 0.0
    %802 = vmatpush1.msra.mxu0 0.0
    %803 = vmatprep.subr.mxu0 0.0
    %804 = vmatpush1.msra.mxu0 0.0
    %805 = vmatprep.subr.mxu0 0.0
    %806 = vmatpush1.msra.mxu0 0.0
    %807 = vmatprep.subr.mxu0 0.0
    %808 = vmatpush1.msra.mxu0 0.0
    %809 = vmatprep.subr.mxu0 0.0
    %810 = vmatpush1.msra.mxu0 0.0
    %811 = vmatprep.subr.mxu0 0.0
    %812 = vmatpush1.msra.mxu0 0.0
    %813 = vmatprep.subr.mxu0 0.0
    %814 = vmatpush1.msra.mxu0 0.0
    %815 = vmatprep.subr.mxu0 0.0
    %816 = vmatpush1.msra.mxu0 0.0
    %817 = vmatprep.subr.mxu0 0.0
    %818 = vmatpush1.msra.mxu0 0.0
    %819 = vmatprep.subr.mxu0 0.0
    %820 = vmatpush1.msra.mxu0 0.0
    %821 = vmatprep.subr.mxu0 0.0
    %822 = vmatpush1.msra.mxu0 0.0
    %823 = vmatprep.subr.mxu0 0.0
    %824 = vmatpush1.msra.mxu0 0.0
    %825 = vmatprep.subr.mxu0 0.0
    %826 = vmatpush1.msra.mxu0 0.0
    %827 = vmatprep.subr.mxu0 0.0
    %828 = vmatpush1.msra.mxu0 0.0
    %829 = vmatprep.subr.mxu0 0.0
    %830 = vmatpush1.msra.mxu0 0.0
    %831 = vmatprep.subr.mxu0 0.0
    %832 = vmatpush1.msra.mxu0 0.0
    %833 = vmatprep.subr.mxu0 0.0
    %834 = vmatpush1.msra.mxu0 0.0
    %835 = vmatprep.subr.mxu0 0.0
    %836 = vmatpush1.msra.mxu0 0.0
    %837 = vmatprep.subr.mxu0 0.0
    %838 = vmatpush1.msra.mxu0 0.0
    %839 = vmatprep.subr.mxu0 0.0
    %840 = vmatpush1.msra.mxu0 0.0
    %841 = vmatprep.subr.mxu0 0.0
    %842 = vmatpush1.msra.mxu0 0.0
    %843 = vmatprep.mubr.f32.mxu0 0.0
    %844 = vmatmul.mubr.f32.gmra.mrb[0].mxu0 %v774
    %v845 = vpop.f32.mrb[0].mxu0
    %v846 = vadd.f32 0.0, %v845
    %v847 = vpop.f32.mrb[0].mxu0
    %848 = vmatprep.mubr.f32.mxu0 0.0
    %849 = vmatmul.mubr.f32.gmra.mrb[0].mxu0 %v777
    %v850 = vpop.f32.mrb[0].mxu0
    %v851 = vadd.f32 0.0, %v850
    %v852 = vpop.f32.mrb[0].mxu0
    %853 = vdwg.mxu0
    %v854 = vadd.f32 %v567, %v846
    %v855 = vadd.f32 %v568, %v851
    %v856 = vmul.f32 %v854, %v854
    %v857 = vmul.f32 %v855, %v855
    %v858 = vsel %vm55, %v856, 0.0
    %859 = vadd.xlane.f32.xlu0 %v858
    %v860 = vpop.xlane.xlu0 %859
    %v861 = vsel %vm55, %v857, 0.0
    %862 = vadd.xlane.f32.xlu0 %v861
    %v863 = vpop.xlane.xlu0 %862
    %v864 = vmul.f32 %v860, %v62
    %v865 = vmul.f32 %v863, %v62
    %v866 = vrsqrt.pop %v864
    %v867 = vrsqrt.pop %v865
    %v868 = vmul.f32 %v854, %v866
    %v869 = vmul.f32 %v855, %v867
    %s870 = scalar_lea.vmem %s3, 32
    %v871 = vld [vmem:[%s870] sm:$0xff]
    %v872 = vld [vmem:[%s870 + $0x8] sm:$0xff]
    %v873 = vld [vmem:[%s870 + $0x10] sm:$0xff]
    %v874 = vld [vmem:[%s870 + $0x18] sm:$0xff]
    %s875 = scalar_lea.vmem %s4, 1
    %v876 = vld [vmem:[%s875] sm:$0x1]
    %v878 = vlaneseq
    %v879 = vshrl.u32 %v878, 7
    %v880 = vsub.s32 0, %v879
    %v881 = vrot.slane %v876, %v880
    %v884 = vsel %vm55, %v868, 0
    %v887 = vsel %vm55, %v869, 0
    %889 = vmatprep.subr.mxu0 0.0
    %890 = vmatpush1.msra.mxu0 %v871
    %891 = vmatprep.subr.mxu0 0.0
    %892 = vmatpush1.msra.mxu0 %v872
    %893 = vmatprep.subr.mxu0 0.0
    %894 = vmatpush1.msra.mxu0 %v873
    %895 = vmatprep.subr.mxu0 0.0
    %896 = vmatpush1.msra.mxu0 %v874
    %897 = vmatprep.subr.mxu0 0.0
    %898 = vmatpush1.msra.mxu0 0.0
    %899 = vmatprep.subr.mxu0 0.0
    %900 = vmatpush1.msra.mxu0 0.0
    %901 = vmatprep.subr.mxu0 0.0
    %902 = vmatpush1.msra.mxu0 0.0
    %903 = vmatprep.subr.mxu0 0.0
    %904 = vmatpush1.msra.mxu0 0.0
    %905 = vmatprep.subr.mxu0 0.0
    %906 = vmatpush1.msra.mxu0 0.0
    %907 = vmatprep.subr.mxu0 0.0
    %908 = vmatpush1.msra.mxu0 0.0
    %909 = vmatprep.subr.mxu0 0.0
    %910 = vmatpush1.msra.mxu0 0.0
    %911 = vmatprep.subr.mxu0 0.0
    %912 = vmatpush1.msra.mxu0 0.0
    %913 = vmatprep.subr.mxu0 0.0
    %914 = vmatpush1.msra.mxu0 0.0
    %915 = vmatprep.subr.mxu0 0.0
    %916 = vmatpush1.msra.mxu0 0.0
    %917 = vmatprep.subr.mxu0 0.0
    %918 = vmatpush1.msra.mxu0 0.0
    %919 = vmatprep.subr.mxu0 0.0
    %920 = vmatpush1.msra.mxu0 0.0
    %921 = vmatprep.subr.mxu0 0.0
    %922 = vmatpush1.msra.mxu0 0.0
    %923 = vmatprep.subr.mxu0 0.0
    %924 = vmatpush1.msra.mxu0 0.0
    %925 = vmatprep.subr.mxu0 0.0
    %926 = vmatpush1.msra.mxu0 0.0
    %927 = vmatprep.subr.mxu0 0.0
    %928 = vmatpush1.msra.mxu0 0.0
    %929 = vmatprep.subr.mxu0 0.0
    %930 = vmatpush1.msra.mxu0 0.0
    %931 = vmatprep.subr.mxu0 0.0
    %932 = vmatpush1.msra.mxu0 0.0
    %933 = vmatprep.subr.mxu0 0.0
    %934 = vmatpush1.msra.mxu0 0.0
    %935 = vmatprep.subr.mxu0 0.0
    %936 = vmatpush1.msra.mxu0 0.0
    %937 = vmatprep.subr.mxu0 0.0
    %938 = vmatpush1.msra.mxu0 0.0
    %939 = vmatprep.subr.mxu0 0.0
    %940 = vmatpush1.msra.mxu0 0.0
    %941 = vmatprep.subr.mxu0 0.0
    %942 = vmatpush1.msra.mxu0 0.0
    %943 = vmatprep.subr.mxu0 0.0
    %944 = vmatpush1.msra.mxu0 0.0
    %945 = vmatprep.subr.mxu0 0.0
    %946 = vmatpush1.msra.mxu0 0.0
    %947 = vmatprep.subr.mxu0 0.0
    %948 = vmatpush1.msra.mxu0 0.0
    %949 = vmatprep.subr.mxu0 0.0
    %950 = vmatpush1.msra.mxu0 0.0
    %951 = vmatprep.subr.mxu0 0.0
    %952 = vmatpush1.msra.mxu0 0.0
    %953 = vmatprep.mubr.f32.mxu0 0.0
    %954 = vmatmul.mubr.f32.gmra.mrb[0].mxu0 %v884
    %v955 = vpop.f32.mrb[0].mxu0
    %v956 = vadd.f32 %v881, %v955
    %v957 = vpop.f32.mrb[0].mxu0
    %958 = vmatprep.mubr.f32.mxu0 0.0
    %959 = vmatmul.mubr.f32.gmra.mrb[0].mxu0 %v887
    %v960 = vpop.f32.mrb[0].mxu0
    %v961 = vadd.f32 %v881, %v960
    %v962 = vpop.f32.mrb[0].mxu0
    %963 = vdwg.mxu0
    %v964 = vmul.f32 %v956, 0.5
    %v965 = vmul.f32 %v961, 0.5
    %v966 = vtanh.pop %v964
    %v967 = vtanh.pop %v965
    %v968 = vadd.f32 %v966, 1.0
    %v969 = vadd.f32 %v967, 1.0
    %v970 = vmul.f32 %v968, 0.5
    %v971 = vmul.f32 %v969, 0.5
    %v972 = vmul.f32 %v956, %v970
    %v973 = vmul.f32 %v961, %v971
    %s974 = scalar_lea.vmem %s5, 96
    %v975 = vld [vmem:[%s974] sm:$0xff]
    %v976 = vld [vmem:[%s974 + $0x8] sm:$0xff]
    %v977 = vld [vmem:[%s974 + $0x10] sm:$0xff]
    %v978 = vld [vmem:[%s974 + $0x18] sm:$0xff]
    %v979 = vld [vmem:[%s974 + $0x20] sm:$0xff]
    %v980 = vld [vmem:[%s974 + $0x28] sm:$0xff]
    %v981 = vld [vmem:[%s974 + $0x30] sm:$0xff]
    %v982 = vld [vmem:[%s974 + $0x38] sm:$0xff]
    %v983 = vld [vmem:[%s974 + $0x40] sm:$0xff]
    %v984 = vld [vmem:[%s974 + $0x48] sm:$0xff]
    %v985 = vld [vmem:[%s974 + $0x50] sm:$0xff]
    %v986 = vld [vmem:[%s974 + $0x58] sm:$0xff]
    %s987 = scalar_lea.vmem %s6, 1
    %v988 = vld [vmem:[%s987] sm:$0x1]
    %v990 = vlaneseq
    %v991 = vshrl.u32 %v990, 7
    %v992 = vsub.s32 0, %v991
    %v993 = vrot.slane %v988, %v992
    %v996 = vsel %vm475, %v972, 0
    %v999 = vsel %vm475, %v973, 0
    %1001 = vmatprep.subr.mxu0 0.0
    %1002 = vmatpush1.msra.mxu0 %v975
    %1003 = vmatprep.subr.mxu0 0.0
    %1004 = vmatpush1.msra.mxu0 %v976
    %1005 = vmatprep.subr.mxu0 0.0
    %1006 = vmatpush1.msra.mxu0 %v977
    %1007 = vmatprep.subr.mxu0 0.0
    %1008 = vmatpush1.msra.mxu0 %v978
    %1009 = vmatprep.subr.mxu0 0.0
    %1010 = vmatpush1.msra.mxu0 %v979
    %1011 = vmatprep.subr.mxu0 0.0
    %1012 = vmatpush1.msra.mxu0 %v980
    %1013 = vmatprep.subr.mxu0 0.0
    %1014 = vmatpush1.msra.mxu0 %v981
    %1015 = vmatprep.subr.mxu0 0.0
    %1016 = vmatpush1.msra.mxu0 %v982
    %1017 = vmatprep.subr.mxu0 0.0
    %1018 = vmatpush1.msra.mxu0 %v983
    %1019 = vmatprep.subr.mxu0 0.0
    %1020 = vmatpush1.msra.mxu0 %v984
    %1021 = vmatprep.subr.mxu0 0.0
    %1022 = vmatpush1.msra.mxu0 %v985
    %1023 = vmatprep.subr.mxu0 0.0
    %1024 = vmatpush1.msra.mxu0 %v986
    %1025 = vmatprep.subr.mxu0 0.0
    %1026 = vmatpush1.msra.mxu0 0.0
    %1027 = vmatprep.subr.mxu0 0.0
    %1028 = vmatpush1.msra.mxu0 0.0
    %1029 = vmatprep.subr.mxu0 0.0
    %1030 = vmatpush1.msra.mxu0 0.0
    %1031 = vmatprep.subr.mxu0 0.0
    %1032 = vmatpush1.msra.mxu0 0.0
    %1033 = vmatprep.subr.mxu0 0.0
    %1034 = vmatpush1.msra.mxu0 0.0
    %1035 = vmatprep.subr.mxu0 0.0
    %1036 = vmatpush1.msra.mxu0 0.0
    %1037 = vmatprep.subr.mxu0 0.0
    %1038 = vmatpush1.msra.mxu0 0.0
    %1039 = vmatprep.subr.mxu0 0.0
    %1040 = vmatpush1.msra.mxu0 0.0
    %1041 = vmatprep.subr.mxu0 0.0
    %1042 = vmatpush1.msra.mxu0 0.0
    %1043 = vmatprep.subr.mxu0 0.0
    %1044 = vmatpush1.msra.mxu0 0.0
    %1045 = vmatprep.subr.mxu0 0.0
    %1046 = vmatpush1.msra.mxu0 0.0
    %1047 = vmatprep.subr.mxu0 0.0
    %1048 = vmatpush1.msra.mxu0 0.0
    %1049 = vmatprep.subr.mxu0 0.0
    %1050 = vmatpush1.msra.mxu0 0.0
    %1051 = vmatprep.subr.mxu0 0.0
    %1052 = vmatpush1.msra.mxu0 0.0
    %1053 = vmatprep.subr.mxu0 0.0
    %1054 = vmatpush1.msra.mxu0 0.0
    %1055 = vmatprep.subr.mxu0 0.0
    %1056 = vmatpush1.msra.mxu0 0.0
    %1057 = vmatprep.subr.mxu0 0.0
    %1058 = vmatpush1.msra.mxu0 0.0
    %1059 = vmatprep.subr.mxu0 0.0
    %1060 = vmatpush1.msra.mxu0 0.0
    %1061 = vmatprep.subr.mxu0 0.0
    %1062 = vmatpush1.msra.mxu0 0.0
    %1063 = vmatprep.subr.mxu0 0.0
    %1064 = vmatpush1.msra.mxu0 0.0
    %1065 = vmatprep.mubr.f32.mxu0 0.0
    %1066 = vmatmul.mubr.f32.gmra.mrb[0].mxu0 %v996
    %v1067 = vpop.f32.mrb[0].mxu0
    %v1068 = vadd.f32 %v993, %v1067
    %v1069 = vpop.f32.mrb[0].mxu0
    %1070 = vmatprep.mubr.f32.mxu0 0.0
    %1071 = vmatmul.mubr.f32.gmra.mrb[0].mxu0 %v999
    %v1072 = vpop.f32.mrb[0].mxu0
    %v1073 = vadd.f32 %v993, %v1072
    %v1074 = vpop.f32.mrb[0].mxu0
    %1075 = vdwg.mxu0
    %v1076 = vmul.f32 %v1068, 0.5
    %v1077 = vmul.f32 %v1073, 0.5
    %v1078 = vtanh.pop %v1076
    %v1079 = vtanh.pop %v1077
    %v1080 = vadd.f32 %v1078, 1.0
    %v1081 = vadd.f32 %v1079, 1.0
    %v1082 = vmul.f32 %v1080, 0.5
    %v1083 = vmul.f32 %v1081, 0.5
    %v1084 = vmul.f32 %v1068, %v1082
    %v1085 = vmul.f32 %v1073, %v1083
    %v1086 = vadd.f32 %v854, %v1084
    %v1087 = vadd.f32 %v855, %v1085
    %1088 = vst.msk [vmem:[#allocation2] sm:$0xff] %vm55, %v1086
    %1089 = vst.msk [vmem:[#allocation2 + $0x8] sm:$0xff] %vm55, %v1087
    // Predicated region
    $region30: #{run_transformer.1} parent=1 // pred_check
      _
    $region31: #{run_transformer.1} parent=1 // pred_check_branch
      %1091 = sbr.rel (0) target = $region33
    $region32: #{run_transformer.1} parent=1 // pred_region
      %s1093 = ssub.s32 256, 256
      %1094 = vsyncadd [#allocation3], %s1093
      %s1095 = sshll.u32 [#allocation2], 4
      %s1096 = int_to_ptr.vmem [resolvable:$true] %s1095
      %1101 = dma.vmem_to_hbm [thread:$0]  %s1096, 256, %s7, [#allocation3], 128, 128, 8
    $region33: #{run_transformer.1} parent=1 // pred_fallthru
      _
    // Predicated region
    $region34: #{run_transformer.1} parent=1 // pred_check
      _
    $region35: #{run_transformer.1} parent=1 // pred_check_branch
      %1103 = sbr.rel (0) target = $region37
    $region36: #{run_transformer.1} parent=1 // pred_region
      %1104 = dma.done [#allocation3], 256
    $region37: #{run_transformer.1} parent=1 // pred_fallthru
      _
    %1105 = vsyncpa [#allocation3], 1

</llo_original>
